<compile_context>
chip_gen: v7x
topology: tpu7x:2x2x1
jax: 0.10.0
libtpu: 0.0.40
codegen_flags: <defaults>
</compile_context>

<pallas_src>
import functools

import jax
import jax.numpy as jnp
from jax.experimental import pallas as pl
from jax.experimental.pallas import tpu as pltpu


def _sparse_arch_fused_kernel(lens_ref, ids_ref, table_ref,
                              remap_ref, emb_ref, loss_ref, *, e0, e1, d):
    """Fused MC remap + single block-diagonal one-hot gather + mean.

    lens_ref  : SMEM (2,)        int32  -- [n0, n1] valid lengths (dynamic)
    ids_ref   : VMEM (n_pad, 2)  int32  -- col 0 = feature_0 ids, col 1 = feature_1
    table_ref : VMEM (e0+e1, 2d) f32    -- block-diagonal stacked tables
    remap_ref : VMEM (n_pad, 2)  int32  -- remapped ids, -1 in padded rows
    emb_ref   : VMEM (n_pad, 2d) f32    -- packed embeddings (f0 | f1), 0 in pads
    loss_ref  : VMEM (1, 1)      f32    -- mean over all valid embedding values
    """
    n_pad = ids_ref.shape[0]
    e_total = e0 + e1

    n0 = lens_ref[0]
    n1 = lens_ref[1]

    ids = ids_ref[...]                                            # (n_pad, 2)
    row = jax.lax.broadcasted_iota(jnp.int32, (n_pad, 2), 0)
    feat = jax.lax.broadcasted_iota(jnp.int32, (n_pad, 2), 1)
    valid = row < jnp.where(feat == 0, n0, n1)                    # (n_pad, 2)

    # Managed-collision remap (stateless modulo hash; see TODO at top).
    # Validity is folded straight into the ids: padded rows become -1, which
    # never matches a one-hot column -> all-zero contribution downstream.
    rem_local = jnp.where(feat == 0, ids % e0, ids % e1)
    rem_local = jnp.where(valid, rem_local, -1)
    remap_ref[...] = rem_local                                    # tiny masked store

    # Global column index into the stacked table (feature_1 offset by e0);
    # guard the offset with `valid` so -1 rows stay -1.
    rem_global = jnp.where(valid,
                           jnp.where(feat == 0, rem_local, rem_local + e0),
                           -1)                                    # (n_pad, 2)

    # Combined one-hot: each row has a hot column in [0, e0) for feature_0 and
    # one in [e0, e0+e1) for feature_1 (when valid).  Because the stacked
    # table is block-diagonal in (row-block, lane-block) space, one matmul
    # gathers both features with no cross-talk.
    col = jax.lax.broadcasted_iota(jnp.int32, (n_pad, e_total), 1)
    hit = (col == rem_global[:, 0:1]) | (col == rem_global[:, 1:2])
    onehot = jnp.where(hit, jnp.float32(1.0), jnp.float32(0.0))
    onehot = onehot.astype(table_ref.dtype)

    # One-hot rows are exact in any precision; HIGHEST keeps the f32 table
    # operand bit-faithful (drop to HIGH/DEFAULT only if that is not required).
    emb = jnp.dot(onehot, table_ref[...],
                  preferred_element_type=jnp.float32,
                  precision=jax.lax.Precision.HIGHEST)            # (n_pad, 2d)
    emb_ref[...] = emb.astype(emb_ref.dtype)                      # unmasked lane-dense store

    # loss = mean(cat([emb_f0, emb_f1], dim=0)); padded/invalid slots are 0 so
    # a full-block sum is correct.  Empty batch -> 0/0 = NaN (matches a mean
    # over an empty concatenation in the reference framework).
    denom = ((n0 + n1) * d).astype(jnp.float32)
    loss = jnp.sum(emb) / denom
    loss_ref[...] = loss[None, None]


def prepare_stacked_table(tables):
    """One-time weight prep: block-diagonal stack of the two tables.

      rows [0, E0)       x lanes [0, D)   <- table_0
      rows [E0, E0 + E1) x lanes [D, 2D)  <- table_1

    Doubles the toy tables' footprint; at production zch sizes keep tables
    separate and switch to a row gather (see scaling notes above).
    """
    t0 = tables["table_0"]
    t1 = tables["table_1"]
    e0, d = t0.shape
    e1, d1 = t1.shape
    assert d == d1, "tables must share the embedding dim"
    stacked = jnp.concatenate(
        [jnp.pad(t0, ((0, 0), (0, d))), jnp.pad(t1, ((0, 0), (d, 0)))], axis=0)
    return stacked, (e0, e1, d)


def sparse_arch_forward(stacked_table, table_dims, feature_ids, n_pad=None):
    """Forward pass of SparseArch.

    stacked_table : (E0+E1, 2*D) f32 block-diagonal weights (prepare_stacked_table)
    table_dims    : (E0, E1, D)
    feature_ids   : {"feature_0": int32[n0], "feature_1": int32[n1]} raw ids
    n_pad         : static padded length (defaults to max(n0, n1) rounded to 8);
                    fix it to a serving max so varying n0/n1 never recompile.

    Returns (loss, remapped_ids, (emb_f0, emb_f1)).
    """
    e0, e1, d = table_dims

    ids0 = feature_ids["feature_0"].astype(jnp.int32)
    ids1 = feature_ids["feature_1"].astype(jnp.int32)
    n0 = int(ids0.shape[0])
    n1 = int(ids1.shape[0])
    if n_pad is None:
        n_pad = max(8, -(-max(n0, n1, 1) // 8) * 8)
    assert n_pad >= max(n0, n1)

    # Per-batch host work kept minimal: two pads + one stack.
    ids = jnp.stack([jnp.pad(ids0, (0, n_pad - n0)),
                     jnp.pad(ids1, (0, n_pad - n1))], axis=1)      # (n_pad, 2)
    lens = jnp.array([n0, n1], dtype=jnp.int32)                    # dynamic -> SMEM

    kernel = functools.partial(_sparse_arch_fused_kernel, e0=e0, e1=e1, d=d)

    vmem = pl.BlockSpec(memory_space=pltpu.MemorySpace.VMEM)
    smem = pl.BlockSpec(memory_space=pltpu.MemorySpace.SMEM)

    remap, emb, loss = pl.pallas_call(
        kernel,
        out_shape=(
            jax.ShapeDtypeStruct((n_pad, 2), jnp.int32),       # remapped ids
            jax.ShapeDtypeStruct((n_pad, 2 * d), jnp.float32),  # packed embeddings
            jax.ShapeDtypeStruct((1, 1), jnp.float32),          # loss
        ),
        in_specs=[smem, vmem, vmem],
        out_specs=(vmem, vmem, vmem),
    )(lens, ids, stacked_table)

    remapped = {
        "feature_0": remap[:n0, 0],
        "feature_1": remap[:n1, 1],
    }
    embeddings = (emb[:n0, :d], emb[:n1, d:])
    return loss[0, 0], remapped, embeddings


if __name__ == "__main__":
    key = jax.random.PRNGKey(0)
    k_t0, k_t1, k_f0, k_f1 = jax.random.split(key, 4)

    # Small, deterministic shapes consistent with the module:
    #   table_0: 16 embeddings, table_1: 32 embeddings, shared dim 64
    #   input_hash_size = 4000, jagged features with 8 and 10 ids.
    D = 64
    E0, E1 = 16, 32
    input_hash_size = 4000

    tables = {
        "table_0": jax.random.normal(k_t0, (E0, D), dtype=jnp.float32),
        "table_1": jax.random.normal(k_t1, (E1, D), dtype=jnp.float32),
    }
    feature_ids = {
        "feature_0": jax.random.randint(k_f0, (8,), 0, input_hash_size,
                                        dtype=jnp.int32),
        "feature_1": jax.random.randint(k_f1, (10,), 0, input_hash_size,
                                        dtype=jnp.int32),
    }

    stacked_table, table_dims = prepare_stacked_table(tables)   # one-time weight prep
    loss, remapped, (emb0, emb1) = sparse_arch_forward(
        stacked_table, table_dims, feature_ids)
    loss = jax.block_until_ready(loss)

    # Pure-JAX reference check.
    rid0 = (feature_ids["feature_0"] % E0).astype(jnp.int32)
    rid1 = (feature_ids["feature_1"] % E1).astype(jnp.int32)
    ref0 = tables["table_0"][rid0]
    ref1 = tables["table_1"][rid1]
    ref_loss = jnp.concatenate([ref0, ref1], axis=0).mean()

    assert jnp.array_equal(remapped["feature_0"], rid0), "feature_0 remap mismatch"
    assert jnp.array_equal(remapped["feature_1"], rid1), "feature_1 remap mismatch"
    assert jnp.allclose(emb0, ref0, atol=1e-5, rtol=1e-5), \
        "feature_0 embedding gather mismatch"
    assert jnp.allclose(emb1, ref1, atol=1e-5, rtol=1e-5), \
        "feature_1 embedding gather mismatch"
    assert jnp.allclose(loss, ref_loss, atol=1e-5, rtol=1e-5), "loss mismatch"

    print("KERNEL_OK")
</pallas_src>

<mosaic_0001>
module attributes {stable_mosaic.version = 11 : i64} {
  func.func @_sparse_arch_fused_kernel(%arg0: memref<2xi32, #tpu.memory_space<smem>>, %arg1: memref<16x2xi32, #tpu.memory_space<vmem>>, %arg2: memref<48x128xf32, #tpu.memory_space<vmem>>, %arg3: memref<16x2xi32, #tpu.memory_space<vmem>>, %arg4: memref<16x128xf32, #tpu.memory_space<vmem>>, %arg5: memref<1x1xf32, #tpu.memory_space<vmem>>) attributes {dimension_semantics = [], scalar_prefetch = 0 : i64, scratch_operands = 0 : i64, tpu.core_type = #tpu.core_type<tc>} {
    %c0 = arith.constant 0 : index
    %0 = memref.load %arg0[%c0] : memref<2xi32, #tpu.memory_space<smem>>
    %c1 = arith.constant 1 : index
    %1 = memref.load %arg0[%c1] : memref<2xi32, #tpu.memory_space<smem>>
    %c0_0 = arith.constant 0 : index
    %c0_1 = arith.constant 0 : index
    %2 = vector.load %arg1[%c0_0, %c0_1] : memref<16x2xi32, #tpu.memory_space<vmem>>, vector<16x2xi32>
    %3 = tpu.iota {dimensions = array<i32: 0>} : vector<16x2xi32>
    %4 = tpu.iota {dimensions = array<i32: 1>} : vector<16x2xi32>
    %c0_i32 = arith.constant 0 : i32
    %5 = vector.broadcast %c0_i32 : i32 to vector<16x2xi32>
    %6 = arith.cmpi eq, %4, %5 : vector<16x2xi32>
    %7 = vector.broadcast %0 : i32 to vector<16x2xi32>
    %8 = vector.broadcast %1 : i32 to vector<16x2xi32>
    %9 = arith.select %6, %7, %8 : vector<16x2xi1>, vector<16x2xi32>
    %10 = arith.cmpi slt, %3, %9 : vector<16x2xi32>
    %c0_i32_2 = arith.constant 0 : i32
    %11 = vector.broadcast %c0_i32_2 : i32 to vector<16x2xi32>
    %12 = arith.cmpi eq, %4, %11 : vector<16x2xi32>
    %c16_i32 = arith.constant 16 : i32
    %c0_i32_3 = arith.constant 0 : i32
    %13 = arith.cmpi eq, %c16_i32, %c0_i32_3 : i32
    %c1_i32 = arith.constant 1 : i32
    %14 = arith.select %13, %c1_i32, %c16_i32 : i32
    %15 = vector.broadcast %14 : i32 to vector<16x2xi32>
    %16 = arith.remsi %2, %15 : vector<16x2xi32>
    %c0_i32_4 = arith.constant 0 : i32
    %17 = vector.broadcast %c0_i32_4 : i32 to vector<16x2xi32>
    %18 = arith.cmpi ne, %16, %17 : vector<16x2xi32>
    %c0_i32_5 = arith.constant 0 : i32
    %19 = vector.broadcast %c0_i32_5 : i32 to vector<16x2xi32>
    %20 = arith.cmpi slt, %16, %19 : vector<16x2xi32>
    %c0_i32_6 = arith.constant 0 : i32
    %21 = arith.cmpi slt, %14, %c0_i32_6 : i32
    %22 = vector.broadcast %21 : i1 to vector<16x2xi1>
    %23 = vector.broadcast %22 : vector<16x2xi1> to vector<16x2xi1>
    %24 = arith.xori %20, %23 : vector<16x2xi1>
    %25 = arith.andi %24, %18 : vector<16x2xi1>
    %26 = vector.broadcast %14 : i32 to vector<16x2xi32>
    %27 = arith.addi %16, %26 : vector<16x2xi32>
    %28 = arith.select %25, %27, %16 : vector<16x2xi1>, vector<16x2xi32>
    %c32_i32 = arith.constant 32 : i32
    %c0_i32_7 = arith.constant 0 : i32
    %29 = arith.cmpi eq, %c32_i32, %c0_i32_7 : i32
    %c1_i32_8 = arith.constant 1 : i32
    %30 = arith.select %29, %c1_i32_8, %c32_i32 : i32
    %31 = vector.broadcast %30 : i32 to vector<16x2xi32>
    %32 = arith.remsi %2, %31 : vector<16x2xi32>
    %c0_i32_9 = arith.constant 0 : i32
    %33 = vector.broadcast %c0_i32_9 : i32 to vector<16x2xi32>
    %34 = arith.cmpi ne, %32, %33 : vector<16x2xi32>
    %c0_i32_10 = arith.constant 0 : i32
    %35 = vector.broadcast %c0_i32_10 : i32 to vector<16x2xi32>
    %36 = arith.cmpi slt, %32, %35 : vector<16x2xi32>
    %c0_i32_11 = arith.constant 0 : i32
    %37 = arith.cmpi slt, %30, %c0_i32_11 : i32
    %38 = vector.broadcast %37 : i1 to vector<16x2xi1>
    %39 = vector.broadcast %38 : vector<16x2xi1> to vector<16x2xi1>
    %40 = arith.xori %36, %39 : vector<16x2xi1>
    %41 = arith.andi %40, %34 : vector<16x2xi1>
    %42 = vector.broadcast %30 : i32 to vector<16x2xi32>
    %43 = arith.addi %32, %42 : vector<16x2xi32>
    %44 = arith.select %41, %43, %32 : vector<16x2xi1>, vector<16x2xi32>
    %45 = arith.select %12, %28, %44 : vector<16x2xi1>, vector<16x2xi32>
    %c-1_i32 = arith.constant -1 : i32
    %46 = vector.broadcast %c-1_i32 : i32 to vector<16x2xi32>
    %47 = arith.select %10, %45, %46 : vector<16x2xi1>, vector<16x2xi32>
    %c0_12 = arith.constant 0 : index
    %c0_13 = arith.constant 0 : index
    %48 = vector.load %arg3[%c0_12, %c0_13] : memref<16x2xi32, #tpu.memory_space<vmem>>, vector<16x2xi32>
    tpu.vector_store %arg3[%c0_12, %c0_13], %47 {strides = array<i32>} : memref<16x2xi32, #tpu.memory_space<vmem>>, vector<16x2xi32>,
    %c0_i32_14 = arith.constant 0 : i32
    %49 = vector.broadcast %c0_i32_14 : i32 to vector<16x2xi32>
    %50 = arith.cmpi eq, %4, %49 : vector<16x2xi32>
    %c16_i32_15 = arith.constant 16 : i32
    %51 = vector.broadcast %c16_i32_15 : i32 to vector<16x2xi32>
    %52 = arith.addi %47, %51 : vector<16x2xi32>
    %53 = arith.select %50, %47, %52 : vector<16x2xi1>, vector<16x2xi32>
    %c-1_i32_16 = arith.constant -1 : i32
    %54 = vector.broadcast %c-1_i32_16 : i32 to vector<16x2xi32>
    %55 = arith.select %10, %53, %54 : vector<16x2xi1>, vector<16x2xi32>
    %56 = tpu.iota {dimensions = array<i32: 1>} : vector<16x48xi32>
    %57 = vector.extract_strided_slice %55 {offsets = [0, 0], sizes = [16, 1], strides = [1, 1]} : vector<16x2xi32> to vector<16x1xi32>
    %58 = vector.broadcast %57 : vector<16x1xi32> to vector<16x48xi32>
    %59 = arith.cmpi eq, %56, %58 : vector<16x48xi32>
    %60 = vector.extract_strided_slice %55 {offsets = [0, 1], sizes = [16, 1], strides = [1, 1]} : vector<16x2xi32> to vector<16x1xi32>
    %61 = vector.broadcast %60 : vector<16x1xi32> to vector<16x48xi32>
    %62 = arith.cmpi eq, %56, %61 : vector<16x48xi32>
    %63 = arith.ori %59, %62 : vector<16x48xi1>
    %cst = arith.constant 1.000000e+00 : f32
    %cst_17 = arith.constant 0.000000e+00 : f32
    %64 = vector.broadcast %cst : f32 to vector<16x48xf32>
    %65 = vector.broadcast %cst_17 : f32 to vector<16x48xf32>
    %66 = arith.select %63, %64, %65 : vector<16x48xi1>, vector<16x48xf32>
    %c0_18 = arith.constant 0 : index
    %c0_19 = arith.constant 0 : index
    %67 = vector.load %arg2[%c0_18, %c0_19] : memref<48x128xf32, #tpu.memory_space<vmem>>, vector<48x128xf32>
    %cst_20 = arith.constant dense<0.000000e+00> : vector<16x128xf32>
    %68 = tpu.matmul %66, %67, %cst_20 {dimension_numbers = #tpu.dot_dimension_numbers<[1], [0], [0], [1], [0, 0, 1, 1], [], []>, precision = #tpu.contract_precision<fp32>} : vector<16x48xf32>, vector<48x128xf32>, vector<16x128xf32> -> vector<16x128xf32>
    %c0_21 = arith.constant 0 : index
    %c0_22 = arith.constant 0 : index
    %69 = vector.load %arg4[%c0_21, %c0_22] : memref<16x128xf32, #tpu.memory_space<vmem>>, vector<16x128xf32>
    tpu.vector_store %arg4[%c0_21, %c0_22], %68 {strides = array<i32>} : memref<16x128xf32, #tpu.memory_space<vmem>>, vector<16x128xf32>,
    %70 = arith.addi %0, %1 : i32
    %c64_i32 = arith.constant 64 : i32
    %71 = arith.muli %70, %c64_i32 : i32
    %72 = arith.sitofp %71 : i32 to f32
    %73 = vector.shape_cast %68 : vector<16x128xf32> to vector<1x16x128xf32>
    %cst_23 = arith.constant dense<0.000000e+00> : vector<1xf32>
    %74 = vector.multi_reduction <add>, %73, %cst_23 [1, 2] : vector<1x16x128xf32> to vector<1xf32>
    %75 = vector.shape_cast %74 : vector<1xf32> to vector<1x1x1xf32>
    %76 = vector.extract %75[0, 0, 0] : f32 from vector<1x1x1xf32>
    %77 = arith.divf %76, %72 : f32
    %78 = vector.broadcast %77 : f32 to vector<1x1xf32>
    %c0_24 = arith.constant 0 : index
    %c0_25 = arith.constant 0 : index
    %79 = vector.load %arg5[%c0_24, %c0_25] : memref<1x1xf32, #tpu.memory_space<vmem>>, vector<1x1xf32>
    tpu.vector_store %arg5[%c0_24, %c0_25], %78 {strides = array<i32>} : memref<1x1xf32, #tpu.memory_space<vmem>>, vector<1x1xf32>,
    return
  }
}

</mosaic_0001>

<llo_original>
// kernel: tpu_custom_call.1
$region0: #{tpu_custom_call.1}
  #allocation0 [shape = 'u32[]', space=smem, size = 0x4, offset = 0x4, fixed_abs, tag = 'smem constant byte address 0x4 - core index']
  #allocation1 [shape = 'u32[144,128]{1,0:T(1,128)}', space=vmem, size = 0x12000, scoped, tag = 'internal scratch']
  %s0 = inlined_call_operand.vmem [shape: s32[2], index: 0, kind: input, shape index: {}]
  %s1 = inlined_call_operand.vmem [shape: s32[16,2], index: 1, kind: input, shape index: {}]
  %s2 = inlined_call_operand.hbm [shape: f32[48,128], index: 2, kind: input, shape index: {}]
  %s3 = inlined_call_operand.vmem [shape: s32[16,2], index: 3, kind: output, shape index: {0}]
  %s4 = inlined_call_operand.hbm [shape: f32[16,128], index: 4, kind: output, shape index: {1}]
  %s5 = inlined_call_operand.hbm [shape: f32[1,1], index: 5, kind: output, shape index: {2}]
  %6 = xla_tuple %s3, %s4, %s5
  %s7 = sld [smem:[#allocation0]]
  $region46: #{tpu_custom_call.1} parent=0
    _
  %s9 = ssub.s32 1, %s7
  %s10 = scalar_select 0, %s9, %s7
  $region1: #{tpu_custom_call.1} parent=0
    #allocation2 [shape = 'u8[512]{0}', space=smem, size = 0x200, scoped, tag = 'input window, operand 0, single buffered']
    #allocation3 [shape = 's32[1]{0}', space=sflag, size = 0x4, scoped, tag = 'scoped memory for tpu_custom_call.1']
    #allocation4 [shape = 's32[1]{0}', space=sflag, size = 0x4, scoped, tag = 'scoped memory for tpu_custom_call.1']
    #allocation5 [shape = 's32[1]{0}', space=sflag, size = 0x4, scoped, tag = 'scoped memory for tpu_custom_call.1']
    #allocation6 [shape = 'u8[24576]{0}', space=vmem, size = 0x6000, scoped, tag = 'input window, operand 2, single buffered']
    #allocation7 [shape = 'u8[8192]{0}', space=vmem, size = 0x2000, scoped, tag = 'output window, operand 1, single buffered']
    #allocation8 [shape = 'u8[512]{0}', space=vmem, size = 0x400, scoped, tag = 'output window, operand 2, single buffered']
    #allocation9 [shape = 's32[1]{0}', space=sflag, size = 0x4, scoped, tag = 'scoped memory for tpu_custom_call.1']
    %11 = vsyncpa [#allocation5], 0
    %12 = vsyncpa [#allocation3], 0
    %13 = vsyncpa [#allocation4], 0
    %14 = vsyncpa [#allocation9], 0
    // Predicated region
    $region2: #{tpu_custom_call.1} parent=1 // pred_check
      _
    $region3: #{tpu_custom_call.1} parent=1 // pred_check_branch
      %16 = sbr.rel (0) target = $region5
    $region4: #{tpu_custom_call.1} parent=1 // pred_region
      %s18 = ssub.s32 16, 16
      %19 = vsyncadd [#allocation5], %s18
      %s21 = sshll.u32 %s0, 4
      %s22 = int_to_ptr.vmem [resolvable:$true] %s21
      %24 = dma.vmem_to_smem %s22, 16, [#allocation2], [#allocation5]
    $region5: #{tpu_custom_call.1} parent=1 // pred_fallthru
      _
    // Predicated region
    $region6: #{tpu_custom_call.1} parent=1 // pred_check
      _
    $region7: #{tpu_custom_call.1} parent=1 // pred_check_branch
      %26 = sbr.rel (0) target = $region9
    $region8: #{tpu_custom_call.1} parent=1 // pred_region
      _
    $region9: #{tpu_custom_call.1} parent=1 // pred_fallthru
      _
    // Predicated region
    $region10: #{tpu_custom_call.1} parent=1 // pred_check
      _
    $region11: #{tpu_custom_call.1} parent=1 // pred_check_branch
      %28 = sbr.rel (0) target = $region13
    $region12: #{tpu_custom_call.1} parent=1 // pred_region
      %s30 = ssub.s32 768, 768
      %31 = vsyncadd [#allocation3], %s30
      %s32 = sshll.u32 [#allocation6], 4
      %s33 = int_to_ptr.vmem [resolvable:$true] %s32
      %38 = dma.hbm_to_vmem [thread:$0]  %s2, 768, %s33, [#allocation3], 128, 128, 8
    $region13: #{tpu_custom_call.1} parent=1 // pred_fallthru
      _
    // Predicated region
    $region14: #{tpu_custom_call.1} parent=1 // pred_check
      _
    $region15: #{tpu_custom_call.1} parent=1 // pred_check_branch
      %40 = sbr.rel (0) target = $region17
    $region16: #{tpu_custom_call.1} parent=1 // pred_region
      %41 = dma.done [#allocation5], 16
    $region17: #{tpu_custom_call.1} parent=1 // pred_fallthru
      _
    // Predicated region
    $region18: #{tpu_custom_call.1} parent=1 // pred_check
      _
    $region19: #{tpu_custom_call.1} parent=1 // pred_check_branch
      %43 = sbr.rel (0) target = $region21
    $region20: #{tpu_custom_call.1} parent=1 // pred_region
      %44 = dma.done [#allocation3], 768
    $region21: #{tpu_custom_call.1} parent=1 // pred_fallthru
      _
    %45 = sfence
    %s46 = sld [smem:[#allocation2]]
    %s47 = sld [smem:[#allocation2 + $0x1]]
    %v48 = vld [vmem:[%s1] sm:$0xff]
    %v49 = vld [vmem:[%s1 + $0x8] sm:$0xff]
    %v50 = vlaneseq
    %v51 = vshrl.u32 %v50, 7
    %v52 = vadd.s32 %v51, 8
    %v53 = vlaneseq
    %v54 = vand.u32 %v53, 127
    %vm55 = vcmp.eq.s32.totalorder %v54, 0
    %v56 = vstv %s46
    %v57 = vstv %s47
    %v58 = vsel %vm55, %v56, %v57
    %vm59 = vcmp.lt.s32.totalorder %v51, %v58
    %vm60 = vcmp.lt.s32.totalorder %v52, %v58
    %vm61 = vcmp.lt.s32.totalorder %v48, 0
    %v62 = vsub.s32 0, %v48
    %v63 = vsel %vm61, %v62, %v48
    %v64 = vshrl.u32 %v63, 4
    %v65 = vand.u32 %v63, 15
    %v66 = vsub.s32 0, %v65
    %v67 = vsel %vm61, %v66, %v65
    %vm68 = vcmp.lt.s32.totalorder %v49, 0
    %v69 = vsub.s32 0, %v49
    %v70 = vsel %vm68, %v69, %v49
    %v71 = vshrl.u32 %v70, 4
    %v72 = vand.u32 %v70, 15
    %v73 = vsub.s32 0, %v72
    %v74 = vsel %vm68, %v73, %v72
    %vm75 = vcmp.ne.s32.totalorder %v67, 0
    %vm76 = vcmp.ne.s32.totalorder %v74, 0
    %vm77 = vcmp.lt.s32.totalorder %v67, 0
    %vm78 = vcmp.lt.s32.totalorder %v74, 0
    %vm79 = vmand %vm77, %vm75
    %vm80 = vmand %vm78, %vm76
    %v81 = vadd.s32 %v67, 16
    %v82 = vadd.s32 %v74, 16
    %v83 = vsel %vm79, %v81, %v67
    %v84 = vsel %vm80, %v82, %v74
    %vm85 = vcmp.lt.s32.totalorder %v48, 0
    %v86 = vsub.s32 0, %v48
    %v87 = vsel %vm85, %v86, %v48
    %v88 = vshrl.u32 %v87, 5
    %v89 = vand.u32 %v87, 31
    %v90 = vsub.s32 0, %v89
    %v91 = vsel %vm85, %v90, %v89
    %vm92 = vcmp.lt.s32.totalorder %v49, 0
    %v93 = vsub.s32 0, %v49
    %v94 = vsel %vm92, %v93, %v49
    %v95 = vshrl.u32 %v94, 5
    %v96 = vand.u32 %v94, 31
    %v97 = vsub.s32 0, %v96
    %v98 = vsel %vm92, %v97, %v96
    %vm99 = vcmp.ne.s32.totalorder %v91, 0
    %vm100 = vcmp.ne.s32.totalorder %v98, 0
    %vm101 = vcmp.lt.s32.totalorder %v91, 0
    %vm102 = vcmp.lt.s32.totalorder %v98, 0
    %vm103 = vmand %vm101, %vm99
    %vm104 = vmand %vm102, %vm100
    %v105 = vadd.s32 %v91, 32
    %v106 = vadd.s32 %v98, 32
    %v107 = vsel %vm103, %v105, %v91
    %v108 = vsel %vm104, %v106, %v98
    %v109 = vsel %vm55, %v83, %v107
    %v110 = vsel %vm55, %v84, %v108
    %v111 = vsel %vm59, %v109, 4294967295
    %v112 = vsel %vm60, %v110, 4294967295
    %vm113 = vcmask 15360
    %114 = vst.msk [vmem:[%s3] sm:$0xff] %vm113, %v111
    %115 = vst.msk [vmem:[%s3 + $0x8] sm:$0xff] %vm113, %v112
    %v116 = vadd.s32 %v111, 16
    %v117 = vadd.s32 %v112, 16
    %v118 = vsel %vm55, %v111, %v116
    %v119 = vsel %vm55, %v112, %v117
    %v120 = vsel %vm59, %v118, 4294967295
    %v121 = vsel %vm60, %v119, 4294967295
    %122 = vset.pattern.permute.xlu0 0
    %123 = vperm.xlu0 %122, %v120
    %v124 = vpop.permute.xlu0 %123
    %125 = vset.pattern.permute.xlu0 0
    %126 = vperm.xlu0 %125, %v121
    %v127 = vpop.permute.xlu0 %126
    %vm128 = vcmp.eq.s32.totalorder %v54, %v124
    %vm129 = vcmp.eq.s32.totalorder %v54, %v127
    %130 = vset.pattern.permute.xlu0 1
    %131 = vperm.xlu0 %130, %v120
    %v132 = vpop.permute.xlu0 %131
    %133 = vset.pattern.permute.xlu0 1
    %134 = vperm.xlu0 %133, %v121
    %v135 = vpop.permute.xlu0 %134
    %vm136 = vcmp.eq.s32.totalorder %v54, %v132
    %vm137 = vcmp.eq.s32.totalorder %v54, %v135
    %vm138 = vmor %vm128, %vm136
    %vm139 = vmor %vm129, %vm137
    %v140 = vsel %vm138, 1.0, 0.0
    %v141 = vsel %vm139, 1.0, 0.0
    %v142 = vld [vmem:[#allocation6] sm:$0xff]
    %v143 = vld [vmem:[#allocation6 + $0x8] sm:$0xff]
    %v144 = vld [vmem:[#allocation6 + $0x10] sm:$0xff]
    %v145 = vld [vmem:[#allocation6 + $0x18] sm:$0xff]
    %v146 = vld [vmem:[#allocation6 + $0x20] sm:$0xff]
    %v147 = vld [vmem:[#allocation6 + $0x28] sm:$0xff]
    %vm148 = vcmask 392192
    %v150 = vsel %vm148, %v140, 0
    %v153 = vsel %vm148, %v141, 0
    %155 = vmatprep.subr.mxu0 0.0
    %v156 = vand.u32 %v142, 4294901760
    %157 = vmatpush1.msra.mxu0 %v156
    %158 = vmatprep.subr.mxu0 0.0
    %v159 = vand.u32 %v143, 4294901760
    %160 = vmatpush1.msra.mxu0 %v159
    %161 = vmatprep.subr.mxu0 0.0
    %v162 = vand.u32 %v144, 4294901760
    %163 = vmatpush1.msra.mxu0 %v162
    %164 = vmatprep.subr.mxu0 0.0
    %v165 = vand.u32 %v145, 4294901760
    %166 = vmatpush1.msra.mxu0 %v165
    %167 = vmatprep.subr.mxu0 0.0
    %v168 = vand.u32 %v146, 4294901760
    %169 = vmatpush1.msra.mxu0 %v168
    %170 = vmatprep.subr.mxu0 0.0
    %v171 = vand.u32 %v147, 4294901760
    %172 = vmatpush1.msra.mxu0 %v171
    %173 = vmatprep.subr.mxu0 0.0
    %174 = vmatpush1.msra.mxu0 0.0
    %175 = vmatprep.subr.mxu0 0.0
    %176 = vmatpush1.msra.mxu0 0.0
    %177 = vmatprep.subr.mxu0 0.0
    %178 = vmatpush1.msra.mxu0 0.0
    %179 = vmatprep.subr.mxu0 0.0
    %180 = vmatpush1.msra.mxu0 0.0
    %181 = vmatprep.subr.mxu0 0.0
    %182 = vmatpush1.msra.mxu0 0.0
    %183 = vmatprep.subr.mxu0 0.0
    %184 = vmatpush1.msra.mxu0 0.0
    %185 = vmatprep.subr.mxu0 0.0
    %186 = vmatpush1.msra.mxu0 0.0
    %187 = vmatprep.subr.mxu0 0.0
    %188 = vmatpush1.msra.mxu0 0.0
    %189 = vmatprep.subr.mxu0 0.0
    %190 = vmatpush1.msra.mxu0 0.0
    %191 = vmatprep.subr.mxu0 0.0
    %192 = vmatpush1.msra.mxu0 0.0
    %193 = vmatprep.subr.mxu0 0.0
    %194 = vmatpush1.msra.mxu0 0.0
    %195 = vmatprep.subr.mxu0 0.0
    %196 = vmatpush1.msra.mxu0 0.0
    %197 = vmatprep.subr.mxu0 0.0
    %198 = vmatpush1.msra.mxu0 0.0
    %199 = vmatprep.subr.mxu0 0.0
    %200 = vmatpush1.msra.mxu0 0.0
    %201 = vmatprep.subr.mxu0 0.0
    %202 = vmatpush1.msra.mxu0 0.0
    %203 = vmatprep.subr.mxu0 0.0
    %204 = vmatpush1.msra.mxu0 0.0
    %205 = vmatprep.subr.mxu0 0.0
    %206 = vmatpush1.msra.mxu0 0.0
    %207 = vmatprep.subr.mxu0 0.0
    %208 = vmatpush1.msra.mxu0 0.0
    %209 = vmatprep.subr.mxu0 0.0
    %210 = vmatpush1.msra.mxu0 0.0
    %211 = vmatprep.subr.mxu0 0.0
    %212 = vmatpush1.msra.mxu0 0.0
    %213 = vmatprep.subr.mxu0 0.0
    %214 = vmatpush1.msra.mxu0 0.0
    %215 = vmatprep.subr.mxu0 0.0
    %216 = vmatpush1.msra.mxu0 0.0
    %217 = vmatprep.subr.mxu0 0.0
    %218 = vmatpush1.msra.mxu0 0.0
    %219 = vmatprep.subr.mxu0 0.0
    %220 = vmatpush1.msra.mxu0 0.0
    %221 = vmatprep.subr.mxu0 0.0
    %222 = vmatpush1.msra.mxu0 0.0
    %223 = vmatprep.subr.mxu0 0.0
    %224 = vmatpush1.msra.mxu0 0.0
    %225 = vmatprep.mubr.f32.mxu0 0.0
    %v226 = vand.u32 %v150, 4294901760
    %v227 = vsub.f32 %v150, %v226
    %v228 = vand.u32 %v227, 4294901760
    %v229 = vsub.f32 %v227, %v228
    %v230 = vand.u32 %v229, 4294901760
    %231 = vmatmul.mubr.f32.gmra.mrb[0].mxu0 %v230
    %v232 = vpop.f32.mrb[0].mxu0
    %v233 = vadd.f32 0.0, %v232
    %v234 = vpop.f32.mrb[0].mxu0
    %235 = vmatprep.mubr.f32.mxu0 0.0
    %v236 = vand.u32 %v153, 4294901760
    %v237 = vsub.f32 %v153, %v236
    %v238 = vand.u32 %v237, 4294901760
    %v239 = vsub.f32 %v237, %v238
    %v240 = vand.u32 %v239, 4294901760
    %241 = vmatmul.mubr.f32.gmra.mrb[0].mxu0 %v240
    %v242 = vpop.f32.mrb[0].mxu0
    %v243 = vadd.f32 0.0, %v242
    %v244 = vpop.f32.mrb[0].mxu0
    %245 = vdwg.mxu0
    %246 = vmatprep.subr.mxu0 0.0
    %v247 = vand.u32 %v142, 4294901760
    %v248 = vsub.f32 %v142, %v247
    %v249 = vand.u32 %v248, 4294901760
    %v250 = vsub.f32 %v248, %v249
    %v251 = vand.u32 %v250, 4294901760
    %252 = vmatpush1.msra.mxu0 %v251
    %253 = vmatprep.subr.mxu0 0.0
    %v254 = vand.u32 %v143, 4294901760
    %v255 = vsub.f32 %v143, %v254
    %v256 = vand.u32 %v255, 4294901760
    %v257 = vsub.f32 %v255, %v256
    %v258 = vand.u32 %v257, 4294901760
    %259 = vmatpush1.msra.mxu0 %v258
    %260 = vmatprep.subr.mxu0 0.0
    %v261 = vand.u32 %v144, 4294901760
    %v262 = vsub.f32 %v144, %v261
    %v263 = vand.u32 %v262, 4294901760
    %v264 = vsub.f32 %v262, %v263
    %v265 = vand.u32 %v264, 4294901760
    %266 = vmatpush1.msra.mxu0 %v265
    %267 = vmatprep.subr.mxu0 0.0
    %v268 = vand.u32 %v145, 4294901760
    %v269 = vsub.f32 %v145, %v268
    %v270 = vand.u32 %v269, 4294901760
    %v271 = vsub.f32 %v269, %v270
    %v272 = vand.u32 %v271, 4294901760
    %273 = vmatpush1.msra.mxu0 %v272
    %274 = vmatprep.subr.mxu0 0.0
    %v275 = vand.u32 %v146, 4294901760
    %v276 = vsub.f32 %v146, %v275
    %v277 = vand.u32 %v276, 4294901760
    %v278 = vsub.f32 %v276, %v277
    %v279 = vand.u32 %v278, 4294901760
    %280 = vmatpush1.msra.mxu0 %v279
    %281 = vmatprep.subr.mxu0 0.0
    %v282 = vand.u32 %v147, 4294901760
    %v283 = vsub.f32 %v147, %v282
    %v284 = vand.u32 %v283, 4294901760
    %v285 = vsub.f32 %v283, %v284
    %v286 = vand.u32 %v285, 4294901760
    %287 = vmatpush1.msra.mxu0 %v286
    %288 = vmatprep.subr.mxu0 0.0
    %289 = vmatpush1.msra.mxu0 0.0
    %290 = vmatprep.subr.mxu0 0.0
    %291 = vmatpush1.msra.mxu0 0.0
    %292 = vmatprep.subr.mxu0 0.0
    %293 = vmatpush1.msra.mxu0 0.0
    %294 = vmatprep.subr.mxu0 0.0
    %295 = vmatpush1.msra.mxu0 0.0
    %296 = vmatprep.subr.mxu0 0.0
    %297 = vmatpush1.msra.mxu0 0.0
    %298 = vmatprep.subr.mxu0 0.0
    %299 = vmatpush1.msra.mxu0 0.0
    %300 = vmatprep.subr.mxu0 0.0
    %301 = vmatpush1.msra.mxu0 0.0
    %302 = vmatprep.subr.mxu0 0.0
    %303 = vmatpush1.msra.mxu0 0.0
    %304 = vmatprep.subr.mxu0 0.0
    %305 = vmatpush1.msra.mxu0 0.0
    %306 = vmatprep.subr.mxu0 0.0
    %307 = vmatpush1.msra.mxu0 0.0
    %308 = vmatprep.subr.mxu0 0.0
    %309 = vmatpush1.msra.mxu0 0.0
    %310 = vmatprep.subr.mxu0 0.0
    %311 = vmatpush1.msra.mxu0 0.0
    %312 = vmatprep.subr.mxu0 0.0
    %313 = vmatpush1.msra.mxu0 0.0
    %314 = vmatprep.subr.mxu0 0.0
    %315 = vmatpush1.msra.mxu0 0.0
    %316 = vmatprep.subr.mxu0 0.0
    %317 = vmatpush1.msra.mxu0 0.0
    %318 = vmatprep.subr.mxu0 0.0
    %319 = vmatpush1.msra.mxu0 0.0
    %320 = vmatprep.subr.mxu0 0.0
    %321 = vmatpush1.msra.mxu0 0.0
    %322 = vmatprep.subr.mxu0 0.0
    %323 = vmatpush1.msra.mxu0 0.0
    %324 = vmatprep.subr.mxu0 0.0
    %325 = vmatpush1.msra.mxu0 0.0
    %326 = vmatprep.subr.mxu0 0.0
    %327 = vmatpush1.msra.mxu0 0.0
    %328 = vmatprep.subr.mxu0 0.0
    %329 = vmatpush1.msra.mxu0 0.0
    %330 = vmatprep.subr.mxu0 0.0
    %331 = vmatpush1.msra.mxu0 0.0
    %332 = vmatprep.subr.mxu0 0.0
    %333 = vmatpush1.msra.mxu0 0.0
    %334 = vmatprep.subr.mxu0 0.0
    %335 = vmatpush1.msra.mxu0 0.0
    %336 = vmatprep.subr.mxu0 0.0
    %337 = vmatpush1.msra.mxu0 0.0
    %338 = vmatprep.subr.mxu0 0.0
    %339 = vmatpush1.msra.mxu0 0.0
    %340 = vmatprep.mubr.f32.mxu0 0.0
    %v341 = vand.u32 %v150, 4294901760
    %342 = vmatmul.mubr.f32.gmra.mrb[0].mxu0 %v341
    %v343 = vpop.f32.mrb[0].mxu0
    %v344 = vadd.f32 %v233, %v343
    %v345 = vpop.f32.mrb[0].mxu0
    %346 = vmatprep.mubr.f32.mxu0 0.0
    %v347 = vand.u32 %v153, 4294901760
    %348 = vmatmul.mubr.f32.gmra.mrb[0].mxu0 %v347
    %v349 = vpop.f32.mrb[0].mxu0
    %v350 = vadd.f32 %v243, %v349
    %v351 = vpop.f32.mrb[0].mxu0
    %352 = vdwg.mxu0
    %353 = vmatprep.subr.mxu0 0.0
    %v354 = vand.u32 %v142, 4294901760
    %v355 = vsub.f32 %v142, %v354
    %356 = vmatpush1.msra.mxu0 %v355
    %357 = vmatprep.subr.mxu0 0.0
    %v358 = vand.u32 %v143, 4294901760
    %v359 = vsub.f32 %v143, %v358
    %360 = vmatpush1.msra.mxu0 %v359
    %361 = vmatprep.subr.mxu0 0.0
    %v362 = vand.u32 %v144, 4294901760
    %v363 = vsub.f32 %v144, %v362
    %364 = vmatpush1.msra.mxu0 %v363
    %365 = vmatprep.subr.mxu0 0.0
    %v366 = vand.u32 %v145, 4294901760
    %v367 = vsub.f32 %v145, %v366
    %368 = vmatpush1.msra.mxu0 %v367
    %369 = vmatprep.subr.mxu0 0.0
    %v370 = vand.u32 %v146, 4294901760
    %v371 = vsub.f32 %v146, %v370
    %372 = vmatpush1.msra.mxu0 %v371
    %373 = vmatprep.subr.mxu0 0.0
    %v374 = vand.u32 %v147, 4294901760
    %v375 = vsub.f32 %v147, %v374
    %376 = vmatpush1.msra.mxu0 %v375
    %377 = vmatprep.subr.mxu0 0.0
    %378 = vmatpush1.msra.mxu0 0.0
    %379 = vmatprep.subr.mxu0 0.0
    %380 = vmatpush1.msra.mxu0 0.0
    %381 = vmatprep.subr.mxu0 0.0
    %382 = vmatpush1.msra.mxu0 0.0
    %383 = vmatprep.subr.mxu0 0.0
    %384 = vmatpush1.msra.mxu0 0.0
    %385 = vmatprep.subr.mxu0 0.0
    %386 = vmatpush1.msra.mxu0 0.0
    %387 = vmatprep.subr.mxu0 0.0
    %388 = vmatpush1.msra.mxu0 0.0
    %389 = vmatprep.subr.mxu0 0.0
    %390 = vmatpush1.msra.mxu0 0.0
    %391 = vmatprep.subr.mxu0 0.0
    %392 = vmatpush1.msra.mxu0 0.0
    %393 = vmatprep.subr.mxu0 0.0
    %394 = vmatpush1.msra.mxu0 0.0
    %395 = vmatprep.subr.mxu0 0.0
    %396 = vmatpush1.msra.mxu0 0.0
    %397 = vmatprep.subr.mxu0 0.0
    %398 = vmatpush1.msra.mxu0 0.0
    %399 = vmatprep.subr.mxu0 0.0
    %400 = vmatpush1.msra.mxu0 0.0
    %401 = vmatprep.subr.mxu0 0.0
    %402 = vmatpush1.msra.mxu0 0.0
    %403 = vmatprep.subr.mxu0 0.0
    %404 = vmatpush1.msra.mxu0 0.0
    %405 = vmatprep.subr.mxu0 0.0
    %406 = vmatpush1.msra.mxu0 0.0
    %407 = vmatprep.subr.mxu0 0.0
    %408 = vmatpush1.msra.mxu0 0.0
    %409 = vmatprep.subr.mxu0 0.0
    %410 = vmatpush1.msra.mxu0 0.0
    %411 = vmatprep.subr.mxu0 0.0
    %412 = vmatpush1.msra.mxu0 0.0
    %413 = vmatprep.subr.mxu0 0.0
    %414 = vmatpush1.msra.mxu0 0.0
    %415 = vmatprep.subr.mxu0 0.0
    %416 = vmatpush1.msra.mxu0 0.0
    %417 = vmatprep.subr.mxu0 0.0
    %418 = vmatpush1.msra.mxu0 0.0
    %419 = vmatprep.subr.mxu0 0.0
    %420 = vmatpush1.msra.mxu0 0.0
    %421 = vmatprep.subr.mxu0 0.0
    %422 = vmatpush1.msra.mxu0 0.0
    %423 = vmatprep.subr.mxu0 0.0
    %424 = vmatpush1.msra.mxu0 0.0
    %425 = vmatprep.subr.mxu0 0.0
    %426 = vmatpush1.msra.mxu0 0.0
    %427 = vmatprep.subr.mxu0 0.0
    %428 = vmatpush1.msra.mxu0 0.0
    %429 = vmatprep.mubr.f32.mxu0 0.0
    %v430 = vand.u32 %v150, 4294901760
    %v431 = vsub.f32 %v150, %v430
    %432 = vmatmul.mubr.f32.gmra.mrb[0].mxu0 %v431
    %v433 = vpop.f32.mrb[0].mxu0
    %v434 = vadd.f32 %v344, %v433
    %v435 = vpop.f32.mrb[0].mxu0
    %436 = vmatprep.mubr.f32.mxu0 0.0
    %v437 = vand.u32 %v153, 4294901760
    %v438 = vsub.f32 %v153, %v437
    %439 = vmatmul.mubr.f32.gmra.mrb[0].mxu0 %v438
    %v440 = vpop.f32.mrb[0].mxu0
    %v441 = vadd.f32 %v350, %v440
    %v442 = vpop.f32.mrb[0].mxu0
    %443 = vdwg.mxu0
    %444 = vmatprep.subr.mxu0 0.0
    %v445 = vand.u32 %v142, 4294901760
    %446 = vmatpush1.msra.mxu0 %v445
    %447 = vmatprep.subr.mxu0 0.0
    %v448 = vand.u32 %v143, 4294901760
    %449 = vmatpush1.msra.mxu0 %v448
    %450 = vmatprep.subr.mxu0 0.0
    %v451 = vand.u32 %v144, 4294901760
    %452 = vmatpush1.msra.mxu0 %v451
    %453 = vmatprep.subr.mxu0 0.0
    %v454 = vand.u32 %v145, 4294901760
    %455 = vmatpush1.msra.mxu0 %v454
    %456 = vmatprep.subr.mxu0 0.0
    %v457 = vand.u32 %v146, 4294901760
    %458 = vmatpush1.msra.mxu0 %v457
    %459 = vmatprep.subr.mxu0 0.0
    %v460 = vand.u32 %v147, 4294901760
    %461 = vmatpush1.msra.mxu0 %v460
    %462 = vmatprep.subr.mxu0 0.0
    %463 = vmatpush1.msra.mxu0 0.0
    %464 = vmatprep.subr.mxu0 0.0
    %465 = vmatpush1.msra.mxu0 0.0
    %466 = vmatprep.subr.mxu0 0.0
    %467 = vmatpush1.msra.mxu0 0.0
    %468 = vmatprep.subr.mxu0 0.0
    %469 = vmatpush1.msra.mxu0 0.0
    %470 = vmatprep.subr.mxu0 0.0
    %471 = vmatpush1.msra.mxu0 0.0
    %472 = vmatprep.subr.mxu0 0.0
    %473 = vmatpush1.msra.mxu0 0.0
    %474 = vmatprep.subr.mxu0 0.0
    %475 = vmatpush1.msra.mxu0 0.0
    %476 = vmatprep.subr.mxu0 0.0
    %477 = vmatpush1.msra.mxu0 0.0
    %478 = vmatprep.subr.mxu0 0.0
    %479 = vmatpush1.msra.mxu0 0.0
    %480 = vmatprep.subr.mxu0 0.0
    %481 = vmatpush1.msra.mxu0 0.0
    %482 = vmatprep.subr.mxu0 0.0
    %483 = vmatpush1.msra.mxu0 0.0
    %484 = vmatprep.subr.mxu0 0.0
    %485 = vmatpush1.msra.mxu0 0.0
    %486 = vmatprep.subr.mxu0 0.0
    %487 = vmatpush1.msra.mxu0 0.0
    %488 = vmatprep.subr.mxu0 0.0
    %489 = vmatpush1.msra.mxu0 0.0
    %490 = vmatprep.subr.mxu0 0.0
    %491 = vmatpush1.msra.mxu0 0.0
    %492 = vmatprep.subr.mxu0 0.0
    %493 = vmatpush1.msra.mxu0 0.0
    %494 = vmatprep.subr.mxu0 0.0
    %495 = vmatpush1.msra.mxu0 0.0
    %496 = vmatprep.subr.mxu0 0.0
    %497 = vmatpush1.msra.mxu0 0.0
    %498 = vmatprep.subr.mxu0 0.0
    %499 = vmatpush1.msra.mxu0 0.0
    %500 = vmatprep.subr.mxu0 0.0
    %501 = vmatpush1.msra.mxu0 0.0
    %502 = vmatprep.subr.mxu0 0.0
    %503 = vmatpush1.msra.mxu0 0.0
    %504 = vmatprep.subr.mxu0 0.0
    %505 = vmatpush1.msra.mxu0 0.0
    %506 = vmatprep.subr.mxu0 0.0
    %507 = vmatpush1.msra.mxu0 0.0
    %508 = vmatprep.subr.mxu0 0.0
    %509 = vmatpush1.msra.mxu0 0.0
    %510 = vmatprep.subr.mxu0 0.0
    %511 = vmatpush1.msra.mxu0 0.0
    %512 = vmatprep.subr.mxu0 0.0
    %513 = vmatpush1.msra.mxu0 0.0
    %514 = vmatprep.mubr.f32.mxu0 0.0
    %v515 = vand.u32 %v150, 4294901760
    %v516 = vsub.f32 %v150, %v515
    %v517 = vand.u32 %v516, 4294901760
    %518 = vmatmul.mubr.f32.gmra.mrb[0].mxu0 %v517
    %v519 = vpop.f32.mrb[0].mxu0
    %v520 = vadd.f32 %v434, %v519
    %v521 = vpop.f32.mrb[0].mxu0
    %522 = vmatprep.mubr.f32.mxu0 0.0
    %v523 = vand.u32 %v153, 4294901760
    %v524 = vsub.f32 %v153, %v523
    %v525 = vand.u32 %v524, 4294901760
    %526 = vmatmul.mubr.f32.gmra.mrb[0].mxu0 %v525
    %v527 = vpop.f32.mrb[0].mxu0
    %v528 = vadd.f32 %v441, %v527
    %v529 = vpop.f32.mrb[0].mxu0
    %530 = vdwg.mxu0
    %531 = vmatprep.subr.mxu0 0.0
    %v532 = vand.u32 %v142, 4294901760
    %v533 = vsub.f32 %v142, %v532
    %v534 = vand.u32 %v533, 4294901760
    %535 = vmatpush1.msra.mxu0 %v534
    %536 = vmatprep.subr.mxu0 0.0
    %v537 = vand.u32 %v143, 4294901760
    %v538 = vsub.f32 %v143, %v537
    %v539 = vand.u32 %v538, 4294901760
    %540 = vmatpush1.msra.mxu0 %v539
    %541 = vmatprep.subr.mxu0 0.0
    %v542 = vand.u32 %v144, 4294901760
    %v543 = vsub.f32 %v144, %v542
    %v544 = vand.u32 %v543, 4294901760
    %545 = vmatpush1.msra.mxu0 %v544
    %546 = vmatprep.subr.mxu0 0.0
    %v547 = vand.u32 %v145, 4294901760
    %v548 = vsub.f32 %v145, %v547
    %v549 = vand.u32 %v548, 4294901760
    %550 = vmatpush1.msra.mxu0 %v549
    %551 = vmatprep.subr.mxu0 0.0
    %v552 = vand.u32 %v146, 4294901760
    %v553 = vsub.f32 %v146, %v552
    %v554 = vand.u32 %v553, 4294901760
    %555 = vmatpush1.msra.mxu0 %v554
    %556 = vmatprep.subr.mxu0 0.0
    %v557 = vand.u32 %v147, 4294901760
    %v558 = vsub.f32 %v147, %v557
    %v559 = vand.u32 %v558, 4294901760
    %560 = vmatpush1.msra.mxu0 %v559
    %561 = vmatprep.subr.mxu0 0.0
    %562 = vmatpush1.msra.mxu0 0.0
    %563 = vmatprep.subr.mxu0 0.0
    %564 = vmatpush1.msra.mxu0 0.0
    %565 = vmatprep.subr.mxu0 0.0
    %566 = vmatpush1.msra.mxu0 0.0
    %567 = vmatprep.subr.mxu0 0.0
    %568 = vmatpush1.msra.mxu0 0.0
    %569 = vmatprep.subr.mxu0 0.0
    %570 = vmatpush1.msra.mxu0 0.0
    %571 = vmatprep.subr.mxu0 0.0
    %572 = vmatpush1.msra.mxu0 0.0
    %573 = vmatprep.subr.mxu0 0.0
    %574 = vmatpush1.msra.mxu0 0.0
    %575 = vmatprep.subr.mxu0 0.0
    %576 = vmatpush1.msra.mxu0 0.0
    %577 = vmatprep.subr.mxu0 0.0
    %578 = vmatpush1.msra.mxu0 0.0
    %579 = vmatprep.subr.mxu0 0.0
    %580 = vmatpush1.msra.mxu0 0.0
    %581 = vmatprep.subr.mxu0 0.0
    %582 = vmatpush1.msra.mxu0 0.0
    %583 = vmatprep.subr.mxu0 0.0
    %584 = vmatpush1.msra.mxu0 0.0
    %585 = vmatprep.subr.mxu0 0.0
    %586 = vmatpush1.msra.mxu0 0.0
    %587 = vmatprep.subr.mxu0 0.0
    %588 = vmatpush1.msra.mxu0 0.0
    %589 = vmatprep.subr.mxu0 0.0
    %590 = vmatpush1.msra.mxu0 0.0
    %591 = vmatprep.subr.mxu0 0.0
    %592 = vmatpush1.msra.mxu0 0.0
    %593 = vmatprep.subr.mxu0 0.0
    %594 = vmatpush1.msra.mxu0 0.0
    %595 = vmatprep.subr.mxu0 0.0
    %596 = vmatpush1.msra.mxu0 0.0
    %597 = vmatprep.subr.mxu0 0.0
    %598 = vmatpush1.msra.mxu0 0.0
    %599 = vmatprep.subr.mxu0 0.0
    %600 = vmatpush1.msra.mxu0 0.0
    %601 = vmatprep.subr.mxu0 0.0
    %602 = vmatpush1.msra.mxu0 0.0
    %603 = vmatprep.subr.mxu0 0.0
    %604 = vmatpush1.msra.mxu0 0.0
    %605 = vmatprep.subr.mxu0 0.0
    %606 = vmatpush1.msra.mxu0 0.0
    %607 = vmatprep.subr.mxu0 0.0
    %608 = vmatpush1.msra.mxu0 0.0
    %609 = vmatprep.subr.mxu0 0.0
    %610 = vmatpush1.msra.mxu0 0.0
    %611 = vmatprep.subr.mxu0 0.0
    %612 = vmatpush1.msra.mxu0 0.0
    %613 = vmatprep.mubr.f32.mxu0 0.0
    %v614 = vand.u32 %v150, 4294901760
    %615 = vmatmul.mubr.f32.gmra.mrb[0].mxu0 %v614
    %v616 = vpop.f32.mrb[0].mxu0
    %v617 = vadd.f32 %v520, %v616
    %v618 = vpop.f32.mrb[0].mxu0
    %619 = vmatprep.mubr.f32.mxu0 0.0
    %v620 = vand.u32 %v153, 4294901760
    %621 = vmatmul.mubr.f32.gmra.mrb[0].mxu0 %v620
    %v622 = vpop.f32.mrb[0].mxu0
    %v623 = vadd.f32 %v528, %v622
    %v624 = vpop.f32.mrb[0].mxu0
    %625 = vdwg.mxu0
    %626 = vmatprep.subr.mxu0 0.0
    %v627 = vand.u32 %v142, 4294901760
    %628 = vmatpush1.msra.mxu0 %v627
    %629 = vmatprep.subr.mxu0 0.0
    %v630 = vand.u32 %v143, 4294901760
    %631 = vmatpush1.msra.mxu0 %v630
    %632 = vmatprep.subr.mxu0 0.0
    %v633 = vand.u32 %v144, 4294901760
    %634 = vmatpush1.msra.mxu0 %v633
    %635 = vmatprep.subr.mxu0 0.0
    %v636 = vand.u32 %v145, 4294901760
    %637 = vmatpush1.msra.mxu0 %v636
    %638 = vmatprep.subr.mxu0 0.0
    %v639 = vand.u32 %v146, 4294901760
    %640 = vmatpush1.msra.mxu0 %v639
    %641 = vmatprep.subr.mxu0 0.0
    %v642 = vand.u32 %v147, 4294901760
    %643 = vmatpush1.msra.mxu0 %v642
    %644 = vmatprep.subr.mxu0 0.0
    %645 = vmatpush1.msra.mxu0 0.0
    %646 = vmatprep.subr.mxu0 0.0
    %647 = vmatpush1.msra.mxu0 0.0
    %648 = vmatprep.subr.mxu0 0.0
    %649 = vmatpush1.msra.mxu0 0.0
    %650 = vmatprep.subr.mxu0 0.0
    %651 = vmatpush1.msra.mxu0 0.0
    %652 = vmatprep.subr.mxu0 0.0
    %653 = vmatpush1.msra.mxu0 0.0
    %654 = vmatprep.subr.mxu0 0.0
    %655 = vmatpush1.msra.mxu0 0.0
    %656 = vmatprep.subr.mxu0 0.0
    %657 = vmatpush1.msra.mxu0 0.0
    %658 = vmatprep.subr.mxu0 0.0
    %659 = vmatpush1.msra.mxu0 0.0
    %660 = vmatprep.subr.mxu0 0.0
    %661 = vmatpush1.msra.mxu0 0.0
    %662 = vmatprep.subr.mxu0 0.0
    %663 = vmatpush1.msra.mxu0 0.0
    %664 = vmatprep.subr.mxu0 0.0
    %665 = vmatpush1.msra.mxu0 0.0
    %666 = vmatprep.subr.mxu0 0.0
    %667 = vmatpush1.msra.mxu0 0.0
    %668 = vmatprep.subr.mxu0 0.0
    %669 = vmatpush1.msra.mxu0 0.0
    %670 = vmatprep.subr.mxu0 0.0
    %671 = vmatpush1.msra.mxu0 0.0
    %672 = vmatprep.subr.mxu0 0.0
    %673 = vmatpush1.msra.mxu0 0.0
    %674 = vmatprep.subr.mxu0 0.0
    %675 = vmatpush1.msra.mxu0 0.0
    %676 = vmatprep.subr.mxu0 0.0
    %677 = vmatpush1.msra.mxu0 0.0
    %678 = vmatprep.subr.mxu0 0.0
    %679 = vmatpush1.msra.mxu0 0.0
    %680 = vmatprep.subr.mxu0 0.0
    %681 = vmatpush1.msra.mxu0 0.0
    %682 = vmatprep.subr.mxu0 0.0
    %683 = vmatpush1.msra.mxu0 0.0
    %684 = vmatprep.subr.mxu0 0.0
    %685 = vmatpush1.msra.mxu0 0.0
    %686 = vmatprep.subr.mxu0 0.0
    %687 = vmatpush1.msra.mxu0 0.0
    %688 = vmatprep.subr.mxu0 0.0
    %689 = vmatpush1.msra.mxu0 0.0
    %690 = vmatprep.subr.mxu0 0.0
    %691 = vmatpush1.msra.mxu0 0.0
    %692 = vmatprep.subr.mxu0 0.0
    %693 = vmatpush1.msra.mxu0 0.0
    %694 = vmatprep.subr.mxu0 0.0
    %695 = vmatpush1.msra.mxu0 0.0
    %696 = vmatprep.mubr.f32.mxu0 0.0
    %v697 = vand.u32 %v150, 4294901760
    %698 = vmatmul.mubr.f32.gmra.mrb[0].mxu0 %v697
    %v699 = vpop.f32.mrb[0].mxu0
    %v700 = vadd.f32 %v617, %v699
    %v701 = vpop.f32.mrb[0].mxu0
    %702 = vmatprep.mubr.f32.mxu0 0.0
    %v703 = vand.u32 %v153, 4294901760
    %704 = vmatmul.mubr.f32.gmra.mrb[0].mxu0 %v703
    %v705 = vpop.f32.mrb[0].mxu0
    %v706 = vadd.f32 %v623, %v705
    %v707 = vpop.f32.mrb[0].mxu0
    %708 = vdwg.mxu0
    %709 = vst [vmem:[#allocation7] sm:$0xff] %v700
    %710 = vst [vmem:[#allocation7 + $0x8] sm:$0xff] %v706
    %s711 = sadd.s32 %s46, %s47
    %s712 = smul.u32 %s711, 64
    %s713 = scvt.s32.f32 %s712
    %v714 = vadd.f32 %v700, %v706
    %715 = vadd.xlane.f32.xlu0 %v714
    %v716 = vpop.xlane.xlu0 %715
    %v717 = vrot.slane %v716, 4
    %v718 = vadd.f32 %v716, %v717
    %v719 = vrot.slane %v718, 2
    %v720 = vadd.f32 %v718, %v719
    %v721 = vrot.slane %v720, 1
    %v722 = vadd.f32 %v720, %v721
    %s723 = vtos %v722
    %v724 = vstv %s713
    %v725 = vrcp.pop %v724
    %s726 = vtos %v725
    %s727 = smul.f32 %s723, %s726
    %v728 = vstv %s727
    %vm729 = vcmask 0
    %730 = vst.msk [vmem:[#allocation8] sm:$0x1] %vm729, %v728
    // Predicated region
    $region22: #{tpu_custom_call.1} parent=1 // pred_check
      _
    $region23: #{tpu_custom_call.1} parent=1 // pred_check_branch
      %732 = sbr.rel (0) target = $region25
    $region24: #{tpu_custom_call.1} parent=1 // pred_region
      _
    $region25: #{tpu_custom_call.1} parent=1 // pred_fallthru
      _
    // Predicated region
    $region26: #{tpu_custom_call.1} parent=1 // pred_check
      _
    $region27: #{tpu_custom_call.1} parent=1 // pred_check_branch
      %734 = sbr.rel (0) target = $region29
    $region28: #{tpu_custom_call.1} parent=1 // pred_region
      %s736 = ssub.s32 256, 256
      %737 = vsyncadd [#allocation4], %s736
      %s738 = sshll.u32 [#allocation7], 4
      %s739 = int_to_ptr.vmem [resolvable:$true] %s738
      %744 = dma.vmem_to_hbm [thread:$0]  %s739, 256, %s4, [#allocation4], 128, 128, 8
    $region29: #{tpu_custom_call.1} parent=1 // pred_fallthru
      _
    // Predicated region
    $region30: #{tpu_custom_call.1} parent=1 // pred_check
      _
    $region31: #{tpu_custom_call.1} parent=1 // pred_check_branch
      %746 = sbr.rel (0) target = $region33
    $region32: #{tpu_custom_call.1} parent=1 // pred_region
      %s748 = ssub.s32 16, 16
      %749 = vsyncadd [#allocation9], %s748
      %s751 = sshll.u32 [#allocation8], 4
      %s752 = int_to_ptr.vmem [resolvable:$true] %s751
      %754 = dma.vmem_to_hbm [thread:$0]  %s752, 16, %s5, [#allocation9]
    $region33: #{tpu_custom_call.1} parent=1 // pred_fallthru
      _
    // Predicated region
    $region34: #{tpu_custom_call.1} parent=1 // pred_check
      _
    $region35: #{tpu_custom_call.1} parent=1 // pred_check_branch
      %756 = sbr.rel (0) target = $region37
    $region36: #{tpu_custom_call.1} parent=1 // pred_region
      _
    $region37: #{tpu_custom_call.1} parent=1 // pred_fallthru
      _
    // Predicated region
    $region38: #{tpu_custom_call.1} parent=1 // pred_check
      _
    $region39: #{tpu_custom_call.1} parent=1 // pred_check_branch
      %758 = sbr.rel (0) target = $region41
    $region40: #{tpu_custom_call.1} parent=1 // pred_region
      %759 = dma.done [#allocation4], 256
    $region41: #{tpu_custom_call.1} parent=1 // pred_fallthru
      _
    // Predicated region
    $region42: #{tpu_custom_call.1} parent=1 // pred_check
      _
    $region43: #{tpu_custom_call.1} parent=1 // pred_check_branch
      %761 = sbr.rel (0) target = $region45
    $region44: #{tpu_custom_call.1} parent=1 // pred_region
      %762 = dma.done [#allocation9], 16
    $region45: #{tpu_custom_call.1} parent=1 // pred_fallthru
      _
    %763 = vsyncpa [#allocation3], 1
    %764 = vsyncpa [#allocation4], 1
    %765 = vsyncpa [#allocation9], 1
    %766 = vsyncpa [#allocation5], 1

</llo_original>
